<compile_context>
chip_gen: v7x
topology: tpu7x:2x2x1
jax: 0.10.0
libtpu: 0.0.40
codegen_flags: <defaults>
</compile_context>

<pallas_src>
import jax
import jax.numpy as jnp
from jax.experimental import pallas as pl
from jax.experimental.pallas import tpu as pltpu

_LANE = 128          # TPU lane width; pad the out-features dim to this
_TILE_B = 256        # batch tile (multiple of 8) for the large-batch path


def _linear_kernel(x_ref, w_ref, b_ref, o_ref):
    """y = x @ w.T + b   (the LazyLinear(10) hot path, run on the MXU).

    x_ref: (TB, F)      activations (f32, or bf16 if compute_dtype is set)
    w_ref: (O_pad, F)   weight in PyTorch (out, in) orientation, lane-dense in F
    b_ref: (1, O_pad)   f32 bias
    o_ref: (TB, O_pad)  f32 output, lane-dense store
    """
    acc = jax.lax.dot_general(
        x_ref[...], w_ref[...],
        dimension_numbers=(((1,), (1,)), ((), ())),    # contract over F (trans_b)
        preferred_element_type=jnp.float32,            # f32 MXU accumulate
    )
    o_ref[...] = (acc + b_ref[...]).astype(o_ref.dtype)


def first_net_forward(x, weight, bias, *, compute_dtype=None):
    """Equivalent of FirstNet.forward: nn.Flatten() -> nn.Linear(F, 10).

    x:       (B, C, H, W) float32   (PyTorch NCHW convention)
    weight:  (O, F) float32          PyTorch nn.Linear layout, F = C*H*W
    bias:    (O,)   float32
    compute_dtype: optional dtype (e.g. jnp.bfloat16) to cast x / weight at the
        pallas_call boundary (halves DMA bytes, useful on v6e/v7x); the matmul
        still accumulates in f32 and the bias add stays in f32.
    returns: (B, O) float32
    """
    B = x.shape[0]
    O, F = weight.shape

    # nn.Flatten(): (B, C, H, W) -> (B, F)  -- glue, plain JAX reshape.
    x2d = x.reshape(B, F)

    # Zero-pad out-features to a lane-dense width.  In a real model this is
    # parameter preprocessing done once at load time, not per-step work.
    O_pad = max(_LANE, ((O + _LANE - 1) // _LANE) * _LANE)
    w = weight
    b = bias.astype(jnp.float32)
    if O_pad != O:
        w = jnp.pad(w, ((0, O_pad - O), (0, 0)))
        b = jnp.pad(b, ((0, O_pad - O),))
    b2d = b.reshape(1, O_pad)

    if compute_dtype is not None:
        x2d = x2d.astype(compute_dtype)
        w = w.astype(compute_dtype)

    out_shape = jax.ShapeDtypeStruct((B, O_pad), jnp.float32)

    if B % _TILE_B == 0 and B > _TILE_B:
        # Large-batch path: tile the batch axis.  Weight/bias index_maps return
        # a constant block so they are DMA'd once and stay VMEM-resident; the
        # batch axis is "parallel" so it can be sharded across both
        # TensorCores on v7x.  No K axis / accumulator scratch is needed since
        # F fits whole in one block.
        out_pad = pl.pallas_call(
            _linear_kernel,
            out_shape=out_shape,
            grid_spec=pltpu.PrefetchScalarGridSpec(
                num_scalar_prefetch=0,
                grid=(B // _TILE_B,),
                in_specs=[
                    pl.BlockSpec((_TILE_B, F), lambda i: (i, 0)),
                    pl.BlockSpec((O_pad, F), lambda i: (0, 0)),
                    pl.BlockSpec((1, O_pad), lambda i: (0, 0)),
                ],
                out_specs=pl.BlockSpec((_TILE_B, O_pad), lambda i: (i, 0)),
            ),
            compiler_params=pltpu.CompilerParams(
                dimension_semantics=("parallel",)),
        )(x2d, w, b2d)
    else:
        # Tiny-batch path (the default B=2 case): a single un-gridded
        # invocation on whole-array VMEM blocks -- no pipeline prologue /
        # double-buffering bookkeeping for a few hundred cycles of work.
        out_pad = pl.pallas_call(
            _linear_kernel,
            out_shape=out_shape,
            in_specs=[
                pl.BlockSpec(memory_space=pltpu.MemorySpace.VMEM),
                pl.BlockSpec(memory_space=pltpu.MemorySpace.VMEM),
                pl.BlockSpec(memory_space=pltpu.MemorySpace.VMEM),
            ],
            out_specs=pl.BlockSpec(memory_space=pltpu.MemorySpace.VMEM),
        )(x2d, w, b2d)

    # Slice the lane padding back off (wrapper glue).
    return out_pad[:, :O]


if __name__ == "__main__":
    # Small shapes consistent with the module: LazyLinear infers F = C*H*W.
    B, C, H, W = 2, 4, 16, 16
    F_in, O = C * H * W, 10

    key = jax.random.PRNGKey(0)
    kx, kw, kb = jax.random.split(key, 3)

    x = jax.random.normal(kx, (B, C, H, W), dtype=jnp.float32)

    # Deterministic parameter init (Kaiming-uniform-ish, like nn.Linear default)
    bound = 1.0 / jnp.sqrt(jnp.float32(F_in))
    weight = jax.random.uniform(kw, (O, F_in), minval=-bound, maxval=bound,
                                dtype=jnp.float32)
    bias = jax.random.uniform(kb, (O,), minval=-bound, maxval=bound,
                              dtype=jnp.float32)

    out = first_net_forward(x, weight, bias)
    jax.block_until_ready(out)

    # Correctness check against a plain-JAX reference of the PyTorch forward.
    ref = x.reshape(B, -1) @ weight.T + bias
    assert out.shape == (B, O)
    assert jnp.allclose(out, ref, atol=1e-4, rtol=1e-4)

    print("KERNEL_OK")
</pallas_src>

<mosaic_0001>
module attributes {stable_mosaic.version = 11 : i64} {
  func.func @_linear_kernel(%arg0: memref<2x1024xf32, #tpu.memory_space<vmem>>, %arg1: memref<128x1024xf32, #tpu.memory_space<vmem>>, %arg2: memref<1x128xf32, #tpu.memory_space<vmem>>, %arg3: memref<2x128xf32, #tpu.memory_space<vmem>>) attributes {dimension_semantics = [], scalar_prefetch = 0 : i64, scratch_operands = 0 : i64, tpu.core_type = #tpu.core_type<tc>} {
    %c0 = arith.constant 0 : index
    %c0_0 = arith.constant 0 : index
    %0 = vector.load %arg0[%c0, %c0_0] : memref<2x1024xf32, #tpu.memory_space<vmem>>, vector<2x1024xf32>
    %c0_1 = arith.constant 0 : index
    %c0_2 = arith.constant 0 : index
    %1 = vector.load %arg1[%c0_1, %c0_2] : memref<128x1024xf32, #tpu.memory_space<vmem>>, vector<128x1024xf32>
    %cst = arith.constant dense<0.000000e+00> : vector<2x128xf32>
    %2 = tpu.matmul %0, %1, %cst {dimension_numbers = #tpu.dot_dimension_numbers<[1], [1], [0], [0], [0, 0, 1, 0], [], []>} : vector<2x1024xf32>, vector<128x1024xf32>, vector<2x128xf32> -> vector<2x128xf32>
    %c0_3 = arith.constant 0 : index
    %c0_4 = arith.constant 0 : index
    %3 = vector.load %arg2[%c0_3, %c0_4] : memref<1x128xf32, #tpu.memory_space<vmem>>, vector<1x128xf32>
    %4 = vector.broadcast %3 : vector<1x128xf32> to vector<2x128xf32>
    %5 = arith.addf %2, %4 : vector<2x128xf32>
    %c0_5 = arith.constant 0 : index
    %c0_6 = arith.constant 0 : index
    %6 = vector.load %arg3[%c0_5, %c0_6] : memref<2x128xf32, #tpu.memory_space<vmem>>, vector<2x128xf32>
    tpu.vector_store %arg3[%c0_5, %c0_6], %5 {strides = array<i32>} : memref<2x128xf32, #tpu.memory_space<vmem>>, vector<2x128xf32>,
    return
  }
}

</mosaic_0001>

<llo_original>
// kernel: tpu_custom_call.1
$region0: #{tpu_custom_call.1}
  #allocation0 [shape = 'u32[]', space=smem, size = 0x4, offset = 0x4, fixed_abs, tag = 'smem constant byte address 0x4 - core index']
  #allocation1 [shape = 'u32[144,128]{1,0:T(1,128)}', space=vmem, size = 0x12000, scoped, tag = 'internal scratch']
  %s0 = inlined_call_operand.hbm [shape: f32[2,1024], index: 0, kind: input, shape index: {}]
  %s1 = inlined_call_operand.hbm [shape: f32[128,1024], index: 1, kind: input, shape index: {}]
  %s2 = inlined_call_operand.vmem [shape: f32[1,128], index: 2, kind: input, shape index: {}]
  %s3 = inlined_call_operand.hbm [shape: f32[2,128], index: 3, kind: output, shape index: {}]
  %s4 = sld [smem:[#allocation0]]
  $region30: #{tpu_custom_call.1} parent=0
    _
  %s6 = ssub.s32 1, %s4
  %s7 = scalar_select 0, %s6, %s4
  $region1: #{tpu_custom_call.1} parent=0
    #allocation2 [shape = 'u8[8192]{0}', space=vmem, size = 0x2000, scoped, tag = 'input window, operand 0, single buffered']
    #allocation3 [shape = 's32[1]{0}', space=sflag, size = 0x4, scoped, tag = 'scoped memory for tpu_custom_call.1']
    #allocation4 [shape = 's32[1]{0}', space=sflag, size = 0x4, scoped, tag = 'scoped memory for tpu_custom_call.1']
    #allocation5 [shape = 'u8[524288]{0}', space=vmem, size = 0x80000, scoped, tag = 'input window, operand 1, single buffered']
    #allocation6 [shape = 's32[1]{0}', space=sflag, size = 0x4, scoped, tag = 'scoped memory for tpu_custom_call.1']
    #allocation7 [shape = 'u8[1024]{0}', space=vmem, size = 0x400, scoped, tag = 'output window, operand 0, single buffered']
    %8 = vsyncpa [#allocation3], 0
    %9 = vsyncpa [#allocation6], 0
    %10 = vsyncpa [#allocation4], 0
    // Predicated region
    $region2: #{tpu_custom_call.1} parent=1 // pred_check
      _
    $region3: #{tpu_custom_call.1} parent=1 // pred_check_branch
      %12 = sbr.rel (0) target = $region5
    $region4: #{tpu_custom_call.1} parent=1 // pred_region
      %s14 = ssub.s32 256, 256
      %15 = vsyncadd [#allocation3], %s14
      %s17 = sshll.u32 [#allocation2], 4
      %s18 = int_to_ptr.vmem [resolvable:$true] %s17
      %20 = dma.hbm_to_vmem [thread:$0]  %s0, 256, %s18, [#allocation3]
    $region5: #{tpu_custom_call.1} parent=1 // pred_fallthru
      _
    // Predicated region
    $region6: #{tpu_custom_call.1} parent=1 // pred_check
      _
    $region7: #{tpu_custom_call.1} parent=1 // pred_check_branch
      %22 = sbr.rel (0) target = $region9
    $region8: #{tpu_custom_call.1} parent=1 // pred_region
      %s24 = ssub.s32 16384, 16384
      %25 = vsyncadd [#allocation6], %s24
      %s26 = sshll.u32 [#allocation5], 4
      %s27 = int_to_ptr.vmem [resolvable:$true] %s26
      %32 = dma.hbm_to_vmem [thread:$0]  %s1, 16384, %s27, [#allocation6], 1024, 1024, 64
    $region9: #{tpu_custom_call.1} parent=1 // pred_fallthru
      _
    // Predicated region
    $region10: #{tpu_custom_call.1} parent=1 // pred_check
      _
    $region11: #{tpu_custom_call.1} parent=1 // pred_check_branch
      %34 = sbr.rel (0) target = $region13
    $region12: #{tpu_custom_call.1} parent=1 // pred_region
      _
    $region13: #{tpu_custom_call.1} parent=1 // pred_fallthru
      _
    // Predicated region
    $region14: #{tpu_custom_call.1} parent=1 // pred_check
      _
    $region15: #{tpu_custom_call.1} parent=1 // pred_check_branch
      %36 = sbr.rel (0) target = $region17
    $region16: #{tpu_custom_call.1} parent=1 // pred_region
      %37 = dma.done [#allocation3], 256
    $region17: #{tpu_custom_call.1} parent=1 // pred_fallthru
      _
    // Predicated region
    $region18: #{tpu_custom_call.1} parent=1 // pred_check
      _
    $region19: #{tpu_custom_call.1} parent=1 // pred_check_branch
      %39 = sbr.rel (0) target = $region21
    $region20: #{tpu_custom_call.1} parent=1 // pred_region
      %40 = dma.done [#allocation6], 16384
    $region21: #{tpu_custom_call.1} parent=1 // pred_fallthru
      _
    %v41 = vld [vmem:[#allocation2] sm:$0xff]
    %v42 = vld [vmem:[#allocation2 + $0x8] sm:$0xff]
    %v43 = vld [vmem:[#allocation5] sm:$0xff]
    %v44 = vld [vmem:[#allocation5 + $0x8] sm:$0xff]
    %v45 = vld [vmem:[#allocation5 + $0x10] sm:$0xff]
    %v46 = vld [vmem:[#allocation5 + $0x18] sm:$0xff]
    %v47 = vld [vmem:[#allocation5 + $0x20] sm:$0xff]
    %v48 = vld [vmem:[#allocation5 + $0x28] sm:$0xff]
    %v49 = vld [vmem:[#allocation5 + $0x30] sm:$0xff]
    %v50 = vld [vmem:[#allocation5 + $0x38] sm:$0xff]
    %v51 = vld [vmem:[#allocation5 + $0x40] sm:$0xff]
    %v52 = vld [vmem:[#allocation5 + $0x48] sm:$0xff]
    %v53 = vld [vmem:[#allocation5 + $0x50] sm:$0xff]
    %v54 = vld [vmem:[#allocation5 + $0x58] sm:$0xff]
    %v55 = vld [vmem:[#allocation5 + $0x60] sm:$0xff]
    %v56 = vld [vmem:[#allocation5 + $0x68] sm:$0xff]
    %v57 = vld [vmem:[#allocation5 + $0x70] sm:$0xff]
    %v58 = vld [vmem:[#allocation5 + $0x78] sm:$0xff]
    %v59 = vld [vmem:[#allocation5 + $0x80] sm:$0xff]
    %v60 = vld [vmem:[#allocation5 + $0x88] sm:$0xff]
    %v61 = vld [vmem:[#allocation5 + $0x90] sm:$0xff]
    %v62 = vld [vmem:[#allocation5 + $0x98] sm:$0xff]
    %v63 = vld [vmem:[#allocation5 + $0xa0] sm:$0xff]
    %v64 = vld [vmem:[#allocation5 + $0xa8] sm:$0xff]
    %v65 = vld [vmem:[#allocation5 + $0xb0] sm:$0xff]
    %v66 = vld [vmem:[#allocation5 + $0xb8] sm:$0xff]
    %v67 = vld [vmem:[#allocation5 + $0xc0] sm:$0xff]
    %v68 = vld [vmem:[#allocation5 + $0xc8] sm:$0xff]
    %v69 = vld [vmem:[#allocation5 + $0xd0] sm:$0xff]
    %v70 = vld [vmem:[#allocation5 + $0xd8] sm:$0xff]
    %v71 = vld [vmem:[#allocation5 + $0xe0] sm:$0xff]
    %v72 = vld [vmem:[#allocation5 + $0xe8] sm:$0xff]
    %v73 = vld [vmem:[#allocation5 + $0xf0] sm:$0xff]
    %v74 = vld [vmem:[#allocation5 + $0xf8] sm:$0xff]
    %v75 = vld [vmem:[#allocation5 + $0x100] sm:$0xff]
    %v76 = vld [vmem:[#allocation5 + $0x108] sm:$0xff]
    %v77 = vld [vmem:[#allocation5 + $0x110] sm:$0xff]
    %v78 = vld [vmem:[#allocation5 + $0x118] sm:$0xff]
    %v79 = vld [vmem:[#allocation5 + $0x120] sm:$0xff]
    %v80 = vld [vmem:[#allocation5 + $0x128] sm:$0xff]
    %v81 = vld [vmem:[#allocation5 + $0x130] sm:$0xff]
    %v82 = vld [vmem:[#allocation5 + $0x138] sm:$0xff]
    %v83 = vld [vmem:[#allocation5 + $0x140] sm:$0xff]
    %v84 = vld [vmem:[#allocation5 + $0x148] sm:$0xff]
    %v85 = vld [vmem:[#allocation5 + $0x150] sm:$0xff]
    %v86 = vld [vmem:[#allocation5 + $0x158] sm:$0xff]
    %v87 = vld [vmem:[#allocation5 + $0x160] sm:$0xff]
    %v88 = vld [vmem:[#allocation5 + $0x168] sm:$0xff]
    %v89 = vld [vmem:[#allocation5 + $0x170] sm:$0xff]
    %v90 = vld [vmem:[#allocation5 + $0x178] sm:$0xff]
    %v91 = vld [vmem:[#allocation5 + $0x180] sm:$0xff]
    %v92 = vld [vmem:[#allocation5 + $0x188] sm:$0xff]
    %v93 = vld [vmem:[#allocation5 + $0x190] sm:$0xff]
    %v94 = vld [vmem:[#allocation5 + $0x198] sm:$0xff]
    %v95 = vld [vmem:[#allocation5 + $0x1a0] sm:$0xff]
    %v96 = vld [vmem:[#allocation5 + $0x1a8] sm:$0xff]
    %v97 = vld [vmem:[#allocation5 + $0x1b0] sm:$0xff]
    %v98 = vld [vmem:[#allocation5 + $0x1b8] sm:$0xff]
    %v99 = vld [vmem:[#allocation5 + $0x1c0] sm:$0xff]
    %v100 = vld [vmem:[#allocation5 + $0x1c8] sm:$0xff]
    %v101 = vld [vmem:[#allocation5 + $0x1d0] sm:$0xff]
    %v102 = vld [vmem:[#allocation5 + $0x1d8] sm:$0xff]
    %v103 = vld [vmem:[#allocation5 + $0x1e0] sm:$0xff]
    %v104 = vld [vmem:[#allocation5 + $0x1e8] sm:$0xff]
    %v105 = vld [vmem:[#allocation5 + $0x1f0] sm:$0xff]
    %v106 = vld [vmem:[#allocation5 + $0x1f8] sm:$0xff]
    %v107 = vld [vmem:[#allocation5 + $0x200] sm:$0xff]
    %v108 = vld [vmem:[#allocation5 + $0x208] sm:$0xff]
    %v109 = vld [vmem:[#allocation5 + $0x210] sm:$0xff]
    %v110 = vld [vmem:[#allocation5 + $0x218] sm:$0xff]
    %v111 = vld [vmem:[#allocation5 + $0x220] sm:$0xff]
    %v112 = vld [vmem:[#allocation5 + $0x228] sm:$0xff]
    %v113 = vld [vmem:[#allocation5 + $0x230] sm:$0xff]
    %v114 = vld [vmem:[#allocation5 + $0x238] sm:$0xff]
    %v115 = vld [vmem:[#allocation5 + $0x240] sm:$0xff]
    %v116 = vld [vmem:[#allocation5 + $0x248] sm:$0xff]
    %v117 = vld [vmem:[#allocation5 + $0x250] sm:$0xff]
    %v118 = vld [vmem:[#allocation5 + $0x258] sm:$0xff]
    %v119 = vld [vmem:[#allocation5 + $0x260] sm:$0xff]
    %v120 = vld [vmem:[#allocation5 + $0x268] sm:$0xff]
    %v121 = vld [vmem:[#allocation5 + $0x270] sm:$0xff]
    %v122 = vld [vmem:[#allocation5 + $0x278] sm:$0xff]
    %v123 = vld [vmem:[#allocation5 + $0x280] sm:$0xff]
    %v124 = vld [vmem:[#allocation5 + $0x288] sm:$0xff]
    %v125 = vld [vmem:[#allocation5 + $0x290] sm:$0xff]
    %v126 = vld [vmem:[#allocation5 + $0x298] sm:$0xff]
    %v127 = vld [vmem:[#allocation5 + $0x2a0] sm:$0xff]
    %v128 = vld [vmem:[#allocation5 + $0x2a8] sm:$0xff]
    %v129 = vld [vmem:[#allocation5 + $0x2b0] sm:$0xff]
    %v130 = vld [vmem:[#allocation5 + $0x2b8] sm:$0xff]
    %v131 = vld [vmem:[#allocation5 + $0x2c0] sm:$0xff]
    %v132 = vld [vmem:[#allocation5 + $0x2c8] sm:$0xff]
    %v133 = vld [vmem:[#allocation5 + $0x2d0] sm:$0xff]
    %v134 = vld [vmem:[#allocation5 + $0x2d8] sm:$0xff]
    %v135 = vld [vmem:[#allocation5 + $0x2e0] sm:$0xff]
    %v136 = vld [vmem:[#allocation5 + $0x2e8] sm:$0xff]
    %v137 = vld [vmem:[#allocation5 + $0x2f0] sm:$0xff]
    %v138 = vld [vmem:[#allocation5 + $0x2f8] sm:$0xff]
    %v139 = vld [vmem:[#allocation5 + $0x300] sm:$0xff]
    %v140 = vld [vmem:[#allocation5 + $0x308] sm:$0xff]
    %v141 = vld [vmem:[#allocation5 + $0x310] sm:$0xff]
    %v142 = vld [vmem:[#allocation5 + $0x318] sm:$0xff]
    %v143 = vld [vmem:[#allocation5 + $0x320] sm:$0xff]
    %v144 = vld [vmem:[#allocation5 + $0x328] sm:$0xff]
    %v145 = vld [vmem:[#allocation5 + $0x330] sm:$0xff]
    %v146 = vld [vmem:[#allocation5 + $0x338] sm:$0xff]
    %v147 = vld [vmem:[#allocation5 + $0x340] sm:$0xff]
    %v148 = vld [vmem:[#allocation5 + $0x348] sm:$0xff]
    %v149 = vld [vmem:[#allocation5 + $0x350] sm:$0xff]
    %v150 = vld [vmem:[#allocation5 + $0x358] sm:$0xff]
    %v151 = vld [vmem:[#allocation5 + $0x360] sm:$0xff]
    %v152 = vld [vmem:[#allocation5 + $0x368] sm:$0xff]
    %v153 = vld [vmem:[#allocation5 + $0x370] sm:$0xff]
    %v154 = vld [vmem:[#allocation5 + $0x378] sm:$0xff]
    %v155 = vld [vmem:[#allocation5 + $0x380] sm:$0xff]
    %v156 = vld [vmem:[#allocation5 + $0x388] sm:$0xff]
    %v157 = vld [vmem:[#allocation5 + $0x390] sm:$0xff]
    %v158 = vld [vmem:[#allocation5 + $0x398] sm:$0xff]
    %v159 = vld [vmem:[#allocation5 + $0x3a0] sm:$0xff]
    %v160 = vld [vmem:[#allocation5 + $0x3a8] sm:$0xff]
    %v161 = vld [vmem:[#allocation5 + $0x3b0] sm:$0xff]
    %v162 = vld [vmem:[#allocation5 + $0x3b8] sm:$0xff]
    %v163 = vld [vmem:[#allocation5 + $0x3c0] sm:$0xff]
    %v164 = vld [vmem:[#allocation5 + $0x3c8] sm:$0xff]
    %v165 = vld [vmem:[#allocation5 + $0x3d0] sm:$0xff]
    %v166 = vld [vmem:[#allocation5 + $0x3d8] sm:$0xff]
    %v167 = vld [vmem:[#allocation5 + $0x3e0] sm:$0xff]
    %v168 = vld [vmem:[#allocation5 + $0x3e8] sm:$0xff]
    %v169 = vld [vmem:[#allocation5 + $0x3f0] sm:$0xff]
    %v170 = vld [vmem:[#allocation5 + $0x3f8] sm:$0xff]
    %v171 = vld [vmem:[%s2] sm:$0x1]
    %v173 = vlaneseq
    %v174 = vshrl.u32 %v173, 7
    %v175 = vsub.s32 0, %v174
    %v176 = vrot.slane %v171, %v175
    %v180 = vcombine.high %v41, %v41
    %v182 = vunpack.c.l.s4 1983009808
    %v183 = vunpack.c.0.s8 %v182
    %v184 = vlaneseq
    %v185 = vshrl.u32 %v184, 7
    %v186 = vsub.s32 %v183, %v185
    %v187 = vrot.slane %v41, %v186
    %v189 = vunpack.c.l.s4 1983009808
    %v190 = vunpack.c.0.s8 %v189
    %v191 = vlaneseq
    %v192 = vshrl.u32 %v191, 7
    %v193 = vsub.s32 %v190, %v192
    %v194 = vrot.slane %v180, %v193
    %v195 = vcombine.high %v187, %v187
    %v196 = vcombine.high %v194, %v194
    %v197 = vcombine.high %v42, %v42
    %v199 = vunpack.c.l.s4 1983009808
    %v200 = vunpack.c.0.s8 %v199
    %v201 = vlaneseq
    %v202 = vshrl.u32 %v201, 7
    %v203 = vsub.s32 %v200, %v202
    %v204 = vrot.slane %v42, %v203
    %v206 = vunpack.c.l.s4 1983009808
    %v207 = vunpack.c.0.s8 %v206
    %v208 = vlaneseq
    %v209 = vshrl.u32 %v208, 7
    %v210 = vsub.s32 %v207, %v209
    %v211 = vrot.slane %v197, %v210
    %v212 = vcombine.high %v204, %v204
    %v213 = vcombine.high %v211, %v211
    %222 = vmatprep.subr.mxu0 %v44
    %223 = vmatpush1.xpose.msra.mxu0 %v43
    %224 = vmatprep.subr.mxu0 %v52
    %225 = vmatpush1.xpose.msra.mxu0 %v51
    %226 = vmatprep.subr.mxu0 %v60
    %227 = vmatpush1.xpose.msra.mxu0 %v59
    %228 = vmatprep.subr.mxu0 %v68
    %229 = vmatpush1.xpose.msra.mxu0 %v67
    %230 = vmatprep.subr.mxu0 %v76
    %231 = vmatpush1.xpose.msra.mxu0 %v75
    %232 = vmatprep.subr.mxu0 %v84
    %233 = vmatpush1.xpose.msra.mxu0 %v83
    %234 = vmatprep.subr.mxu0 %v92
    %235 = vmatpush1.xpose.msra.mxu0 %v91
    %236 = vmatprep.subr.mxu0 %v100
    %237 = vmatpush1.xpose.msra.mxu0 %v99
    %238 = vmatprep.subr.mxu0 %v108
    %239 = vmatpush1.xpose.msra.mxu0 %v107
    %240 = vmatprep.subr.mxu0 %v116
    %241 = vmatpush1.xpose.msra.mxu0 %v115
    %242 = vmatprep.subr.mxu0 %v124
    %243 = vmatpush1.xpose.msra.mxu0 %v123
    %244 = vmatprep.subr.mxu0 %v132
    %245 = vmatpush1.xpose.msra.mxu0 %v131
    %246 = vmatprep.subr.mxu0 %v140
    %247 = vmatpush1.xpose.msra.mxu0 %v139
    %248 = vmatprep.subr.mxu0 %v148
    %249 = vmatpush1.xpose.msra.mxu0 %v147
    %250 = vmatprep.subr.mxu0 %v156
    %251 = vmatpush1.xpose.msra.mxu0 %v155
    %252 = vmatprep.subr.mxu0 %v164
    %253 = vmatpush1.xpose.msra.mxu0 %v163
    %254 = vmatprep.subr.mxu0 0.0
    %255 = vmatpush1.xpose.msra.mxu0 0.0
    %256 = vmatprep.subr.mxu0 0.0
    %257 = vmatpush1.xpose.msra.mxu0 0.0
    %258 = vmatprep.subr.mxu0 0.0
    %259 = vmatpush1.xpose.msra.mxu0 0.0
    %260 = vmatprep.subr.mxu0 0.0
    %261 = vmatpush1.xpose.msra.mxu0 0.0
    %262 = vmatprep.subr.mxu0 0.0
    %263 = vmatpush1.xpose.msra.mxu0 0.0
    %264 = vmatprep.subr.mxu0 0.0
    %265 = vmatpush1.xpose.msra.mxu0 0.0
    %266 = vmatprep.subr.mxu0 0.0
    %267 = vmatpush1.xpose.msra.mxu0 0.0
    %268 = vmatprep.subr.mxu0 0.0
    %269 = vmatpush1.xpose.msra.mxu0 0.0
    %270 = vmatprep.subr.mxu0 0.0
    %271 = vmatpush1.xpose.msra.mxu0 0.0
    %272 = vmatprep.subr.mxu0 0.0
    %273 = vmatpush1.xpose.msra.mxu0 0.0
    %274 = vmatprep.subr.mxu0 0.0
    %275 = vmatpush1.xpose.msra.mxu0 0.0
    %276 = vmatprep.subr.mxu0 0.0
    %277 = vmatpush1.xpose.msra.mxu0 0.0
    %278 = vmatprep.subr.mxu0 0.0
    %279 = vmatpush1.xpose.msra.mxu0 0.0
    %280 = vmatprep.subr.mxu0 0.0
    %281 = vmatpush1.xpose.msra.mxu0 0.0
    %282 = vmatprep.subr.mxu0 0.0
    %283 = vmatpush1.xpose.msra.mxu0 0.0
    %284 = vmatprep.subr.mxu0 0.0
    %285 = vmatpush1.xpose.msra.mxu0 0.0
    %286 = vmatprep.mubr.f32.mxu0 %v195
    %287 = vmatmul.mubr.f32.gmra.mrb[0].mxu0 %v187
    %v288 = vpop.f32.mrb[0].mxu0
    %v289 = vadd.f32 %v176, %v288
    %v290 = vpop.f32.mrb[0].mxu0
    %291 = vdwg.mxu0
    %292 = vmatprep.subr.mxu0 %v46
    %293 = vmatpush1.xpose.msra.mxu0 %v45
    %294 = vmatprep.subr.mxu0 %v54
    %295 = vmatpush1.xpose.msra.mxu0 %v53
    %296 = vmatprep.subr.mxu0 %v62
    %297 = vmatpush1.xpose.msra.mxu0 %v61
    %298 = vmatprep.subr.mxu0 %v70
    %299 = vmatpush1.xpose.msra.mxu0 %v69
    %300 = vmatprep.subr.mxu0 %v78
    %301 = vmatpush1.xpose.msra.mxu0 %v77
    %302 = vmatprep.subr.mxu0 %v86
    %303 = vmatpush1.xpose.msra.mxu0 %v85
    %304 = vmatprep.subr.mxu0 %v94
    %305 = vmatpush1.xpose.msra.mxu0 %v93
    %306 = vmatprep.subr.mxu0 %v102
    %307 = vmatpush1.xpose.msra.mxu0 %v101
    %308 = vmatprep.subr.mxu0 %v110
    %309 = vmatpush1.xpose.msra.mxu0 %v109
    %310 = vmatprep.subr.mxu0 %v118
    %311 = vmatpush1.xpose.msra.mxu0 %v117
    %312 = vmatprep.subr.mxu0 %v126
    %313 = vmatpush1.xpose.msra.mxu0 %v125
    %314 = vmatprep.subr.mxu0 %v134
    %315 = vmatpush1.xpose.msra.mxu0 %v133
    %316 = vmatprep.subr.mxu0 %v142
    %317 = vmatpush1.xpose.msra.mxu0 %v141
    %318 = vmatprep.subr.mxu0 %v150
    %319 = vmatpush1.xpose.msra.mxu0 %v149
    %320 = vmatprep.subr.mxu0 %v158
    %321 = vmatpush1.xpose.msra.mxu0 %v157
    %322 = vmatprep.subr.mxu0 %v166
    %323 = vmatpush1.xpose.msra.mxu0 %v165
    %324 = vmatprep.subr.mxu0 0.0
    %325 = vmatpush1.xpose.msra.mxu0 0.0
    %326 = vmatprep.subr.mxu0 0.0
    %327 = vmatpush1.xpose.msra.mxu0 0.0
    %328 = vmatprep.subr.mxu0 0.0
    %329 = vmatpush1.xpose.msra.mxu0 0.0
    %330 = vmatprep.subr.mxu0 0.0
    %331 = vmatpush1.xpose.msra.mxu0 0.0
    %332 = vmatprep.subr.mxu0 0.0
    %333 = vmatpush1.xpose.msra.mxu0 0.0
    %334 = vmatprep.subr.mxu0 0.0
    %335 = vmatpush1.xpose.msra.mxu0 0.0
    %336 = vmatprep.subr.mxu0 0.0
    %337 = vmatpush1.xpose.msra.mxu0 0.0
    %338 = vmatprep.subr.mxu0 0.0
    %339 = vmatpush1.xpose.msra.mxu0 0.0
    %340 = vmatprep.subr.mxu0 0.0
    %341 = vmatpush1.xpose.msra.mxu0 0.0
    %342 = vmatprep.subr.mxu0 0.0
    %343 = vmatpush1.xpose.msra.mxu0 0.0
    %344 = vmatprep.subr.mxu0 0.0
    %345 = vmatpush1.xpose.msra.mxu0 0.0
    %346 = vmatprep.subr.mxu0 0.0
    %347 = vmatpush1.xpose.msra.mxu0 0.0
    %348 = vmatprep.subr.mxu0 0.0
    %349 = vmatpush1.xpose.msra.mxu0 0.0
    %350 = vmatprep.subr.mxu0 0.0
    %351 = vmatpush1.xpose.msra.mxu0 0.0
    %352 = vmatprep.subr.mxu0 0.0
    %353 = vmatpush1.xpose.msra.mxu0 0.0
    %354 = vmatprep.subr.mxu0 0.0
    %355 = vmatpush1.xpose.msra.mxu0 0.0
    %356 = vmatprep.mubr.f32.mxu0 %v196
    %357 = vmatmul.mubr.f32.gmra.mrb[0].mxu0 %v194
    %v358 = vpop.f32.mrb[0].mxu0
    %v359 = vadd.f32 %v289, %v358
    %v360 = vpop.f32.mrb[0].mxu0
    %361 = vdwg.mxu0
    %362 = vmatprep.subr.mxu0 %v48
    %363 = vmatpush1.xpose.msra.mxu0 %v47
    %364 = vmatprep.subr.mxu0 %v56
    %365 = vmatpush1.xpose.msra.mxu0 %v55
    %366 = vmatprep.subr.mxu0 %v64
    %367 = vmatpush1.xpose.msra.mxu0 %v63
    %368 = vmatprep.subr.mxu0 %v72
    %369 = vmatpush1.xpose.msra.mxu0 %v71
    %370 = vmatprep.subr.mxu0 %v80
    %371 = vmatpush1.xpose.msra.mxu0 %v79
    %372 = vmatprep.subr.mxu0 %v88
    %373 = vmatpush1.xpose.msra.mxu0 %v87
    %374 = vmatprep.subr.mxu0 %v96
    %375 = vmatpush1.xpose.msra.mxu0 %v95
    %376 = vmatprep.subr.mxu0 %v104
    %377 = vmatpush1.xpose.msra.mxu0 %v103
    %378 = vmatprep.subr.mxu0 %v112
    %379 = vmatpush1.xpose.msra.mxu0 %v111
    %380 = vmatprep.subr.mxu0 %v120
    %381 = vmatpush1.xpose.msra.mxu0 %v119
    %382 = vmatprep.subr.mxu0 %v128
    %383 = vmatpush1.xpose.msra.mxu0 %v127
    %384 = vmatprep.subr.mxu0 %v136
    %385 = vmatpush1.xpose.msra.mxu0 %v135
    %386 = vmatprep.subr.mxu0 %v144
    %387 = vmatpush1.xpose.msra.mxu0 %v143
    %388 = vmatprep.subr.mxu0 %v152
    %389 = vmatpush1.xpose.msra.mxu0 %v151
    %390 = vmatprep.subr.mxu0 %v160
    %391 = vmatpush1.xpose.msra.mxu0 %v159
    %392 = vmatprep.subr.mxu0 %v168
    %393 = vmatpush1.xpose.msra.mxu0 %v167
    %394 = vmatprep.subr.mxu0 0.0
    %395 = vmatpush1.xpose.msra.mxu0 0.0
    %396 = vmatprep.subr.mxu0 0.0
    %397 = vmatpush1.xpose.msra.mxu0 0.0
    %398 = vmatprep.subr.mxu0 0.0
    %399 = vmatpush1.xpose.msra.mxu0 0.0
    %400 = vmatprep.subr.mxu0 0.0
    %401 = vmatpush1.xpose.msra.mxu0 0.0
    %402 = vmatprep.subr.mxu0 0.0
    %403 = vmatpush1.xpose.msra.mxu0 0.0
    %404 = vmatprep.subr.mxu0 0.0
    %405 = vmatpush1.xpose.msra.mxu0 0.0
    %406 = vmatprep.subr.mxu0 0.0
    %407 = vmatpush1.xpose.msra.mxu0 0.0
    %408 = vmatprep.subr.mxu0 0.0
    %409 = vmatpush1.xpose.msra.mxu0 0.0
    %410 = vmatprep.subr.mxu0 0.0
    %411 = vmatpush1.xpose.msra.mxu0 0.0
    %412 = vmatprep.subr.mxu0 0.0
    %413 = vmatpush1.xpose.msra.mxu0 0.0
    %414 = vmatprep.subr.mxu0 0.0
    %415 = vmatpush1.xpose.msra.mxu0 0.0
    %416 = vmatprep.subr.mxu0 0.0
    %417 = vmatpush1.xpose.msra.mxu0 0.0
    %418 = vmatprep.subr.mxu0 0.0
    %419 = vmatpush1.xpose.msra.mxu0 0.0
    %420 = vmatprep.subr.mxu0 0.0
    %421 = vmatpush1.xpose.msra.mxu0 0.0
    %422 = vmatprep.subr.mxu0 0.0
    %423 = vmatpush1.xpose.msra.mxu0 0.0
    %424 = vmatprep.subr.mxu0 0.0
    %425 = vmatpush1.xpose.msra.mxu0 0.0
    %426 = vmatprep.mubr.f32.mxu0 %v212
    %427 = vmatmul.mubr.f32.gmra.mrb[0].mxu0 %v204
    %v428 = vpop.f32.mrb[0].mxu0
    %v429 = vadd.f32 %v359, %v428
    %v430 = vpop.f32.mrb[0].mxu0
    %431 = vdwg.mxu0
    %432 = vmatprep.subr.mxu0 %v50
    %433 = vmatpush1.xpose.msra.mxu0 %v49
    %434 = vmatprep.subr.mxu0 %v58
    %435 = vmatpush1.xpose.msra.mxu0 %v57
    %436 = vmatprep.subr.mxu0 %v66
    %437 = vmatpush1.xpose.msra.mxu0 %v65
    %438 = vmatprep.subr.mxu0 %v74
    %439 = vmatpush1.xpose.msra.mxu0 %v73
    %440 = vmatprep.subr.mxu0 %v82
    %441 = vmatpush1.xpose.msra.mxu0 %v81
    %442 = vmatprep.subr.mxu0 %v90
    %443 = vmatpush1.xpose.msra.mxu0 %v89
    %444 = vmatprep.subr.mxu0 %v98
    %445 = vmatpush1.xpose.msra.mxu0 %v97
    %446 = vmatprep.subr.mxu0 %v106
    %447 = vmatpush1.xpose.msra.mxu0 %v105
    %448 = vmatprep.subr.mxu0 %v114
    %449 = vmatpush1.xpose.msra.mxu0 %v113
    %450 = vmatprep.subr.mxu0 %v122
    %451 = vmatpush1.xpose.msra.mxu0 %v121
    %452 = vmatprep.subr.mxu0 %v130
    %453 = vmatpush1.xpose.msra.mxu0 %v129
    %454 = vmatprep.subr.mxu0 %v138
    %455 = vmatpush1.xpose.msra.mxu0 %v137
    %456 = vmatprep.subr.mxu0 %v146
    %457 = vmatpush1.xpose.msra.mxu0 %v145
    %458 = vmatprep.subr.mxu0 %v154
    %459 = vmatpush1.xpose.msra.mxu0 %v153
    %460 = vmatprep.subr.mxu0 %v162
    %461 = vmatpush1.xpose.msra.mxu0 %v161
    %462 = vmatprep.subr.mxu0 %v170
    %463 = vmatpush1.xpose.msra.mxu0 %v169
    %464 = vmatprep.subr.mxu0 0.0
    %465 = vmatpush1.xpose.msra.mxu0 0.0
    %466 = vmatprep.subr.mxu0 0.0
    %467 = vmatpush1.xpose.msra.mxu0 0.0
    %468 = vmatprep.subr.mxu0 0.0
    %469 = vmatpush1.xpose.msra.mxu0 0.0
    %470 = vmatprep.subr.mxu0 0.0
    %471 = vmatpush1.xpose.msra.mxu0 0.0
    %472 = vmatprep.subr.mxu0 0.0
    %473 = vmatpush1.xpose.msra.mxu0 0.0
    %474 = vmatprep.subr.mxu0 0.0
    %475 = vmatpush1.xpose.msra.mxu0 0.0
    %476 = vmatprep.subr.mxu0 0.0
    %477 = vmatpush1.xpose.msra.mxu0 0.0
    %478 = vmatprep.subr.mxu0 0.0
    %479 = vmatpush1.xpose.msra.mxu0 0.0
    %480 = vmatprep.subr.mxu0 0.0
    %481 = vmatpush1.xpose.msra.mxu0 0.0
    %482 = vmatprep.subr.mxu0 0.0
    %483 = vmatpush1.xpose.msra.mxu0 0.0
    %484 = vmatprep.subr.mxu0 0.0
    %485 = vmatpush1.xpose.msra.mxu0 0.0
    %486 = vmatprep.subr.mxu0 0.0
    %487 = vmatpush1.xpose.msra.mxu0 0.0
    %488 = vmatprep.subr.mxu0 0.0
    %489 = vmatpush1.xpose.msra.mxu0 0.0
    %490 = vmatprep.subr.mxu0 0.0
    %491 = vmatpush1.xpose.msra.mxu0 0.0
    %492 = vmatprep.subr.mxu0 0.0
    %493 = vmatpush1.xpose.msra.mxu0 0.0
    %494 = vmatprep.subr.mxu0 0.0
    %495 = vmatpush1.xpose.msra.mxu0 0.0
    %496 = vmatprep.mubr.f32.mxu0 %v213
    %497 = vmatmul.mubr.f32.gmra.mrb[0].mxu0 %v211
    %v498 = vpop.f32.mrb[0].mxu0
    %v499 = vadd.f32 %v429, %v498
    %v500 = vpop.f32.mrb[0].mxu0
    %501 = vdwg.mxu0
    %502 = vst [vmem:[#allocation7] sm:$0x3] %v499
    // Predicated region
    $region22: #{tpu_custom_call.1} parent=1 // pred_check
      _
    $region23: #{tpu_custom_call.1} parent=1 // pred_check_branch
      %504 = sbr.rel (0) target = $region25
    $region24: #{tpu_custom_call.1} parent=1 // pred_region
      %s506 = ssub.s32 32, 32
      %507 = vsyncadd [#allocation4], %s506
      %s509 = sshll.u32 [#allocation7], 4
      %s510 = int_to_ptr.vmem [resolvable:$true] %s509
      %512 = dma.vmem_to_hbm [thread:$0]  %s510, 32, %s3, [#allocation4]
    $region25: #{tpu_custom_call.1} parent=1 // pred_fallthru
      _
    // Predicated region
    $region26: #{tpu_custom_call.1} parent=1 // pred_check
      _
    $region27: #{tpu_custom_call.1} parent=1 // pred_check_branch
      %514 = sbr.rel (0) target = $region29
    $region28: #{tpu_custom_call.1} parent=1 // pred_region
      %515 = dma.done [#allocation4], 32
    $region29: #{tpu_custom_call.1} parent=1 // pred_fallthru
      _
    %516 = vsyncpa [#allocation3], 1
    %517 = vsyncpa [#allocation6], 1
    %518 = vsyncpa [#allocation4], 1

</llo_original>
